<compile_context>
chip_gen: v7x
topology: tpu7x:2x2x1
jax: 0.10.0
libtpu: 0.0.40
codegen_flags: <defaults>
</compile_context>

<pallas_src>
import math
from functools import partial

import jax
import jax.numpy as jnp
import numpy as np
from jax.experimental import pallas as pl
from jax.experimental.pallas import tpu as pltpu

# -------------------- problem sizes (small, consistent with the module) ----------
D_MODEL = 32      # d_model
NHEAD = 4         # nhead
HEAD_DIM = D_MODEL // NHEAD
B = 2             # batch
LQ = 8            # number of queries (tgt length)
LK = 16           # memory length
EPS = 1e-5        # LayerNorm eps (PyTorch default)


# -------------------- Pallas kernel ------------------------------------------
def cross_attn_kernel(acts_ref, par_ref, out_ref, *, b, lq, lk, nhead, head_dim):
    """acts_ref: (2*b*lq + 2*b*lk, D) = [tgt; query_pos; memory; pos]  (row-stacked)
       par_ref : (4*D + nhead*lq + 6 + pad, D) =
                 [Wq.T*s; Wk.T; Wv.T; Wo.T; head-mask; bq*s; bk; bv; bo; gamma; beta; 0-pad]
       out_ref : (b*lq, D)
    """
    d = nhead * head_dim
    nq = b * lq
    nk = b * lk

    # ---- unpack activations (all row slices are multiples of 8 -> tile aligned) ----
    tgt = acts_ref[0:nq, :]                                     # (nq, D)
    q_in = tgt + acts_ref[nq:2 * nq, :]                         # tgt + query_pos
    mem = acts_ref[2 * nq:2 * nq + nk, :]                       # (nk, D)
    k_in = mem + acts_ref[2 * nq + nk:2 * nq + 2 * nk, :]       # memory + pos

    # ---- unpack parameters ----------------------------------------------------
    wq = par_ref[0 * d:1 * d, :]          # pre-transposed; 1/sqrt(head_dim) folded in
    wk = par_ref[1 * d:2 * d, :]
    wv = par_ref[2 * d:3 * d, :]
    wo = par_ref[3 * d:4 * d, :]
    qmask = par_ref[4 * d:4 * d + nhead * lq, :]                # (nhead*lq, D) 0/1 head mask
    vrow = 4 * d + nhead * lq
    bq = par_ref[vrow + 0:vrow + 1, :]                          # already scaled by 1/sqrt(dh)
    bk = par_ref[vrow + 1:vrow + 2, :]
    bv = par_ref[vrow + 2:vrow + 3, :]
    bo = par_ref[vrow + 3:vrow + 4, :]
    gamma = par_ref[vrow + 4:vrow + 5, :]
    beta = par_ref[vrow + 5:vrow + 6, :]

    # ---- in-projections (2-D MXU matmuls) --------------------------------------
    q = jnp.dot(q_in, wq, preferred_element_type=jnp.float32) + bq   # (nq, D)
    k = jnp.dot(k_in, wk, preferred_element_type=jnp.float32) + bk   # (nk, D)
    v = jnp.dot(mem,  wv, preferred_element_type=jnp.float32) + bv   # (nk, D)

    q3 = q.reshape(b, lq, d)
    k3 = k.reshape(b, lk, d)
    v3 = v.reshape(b, lk, d)

    # ---- multi-head attention without lane-dim slicing / concatenation ----------
    # Replicate queries along the row axis (one block per head) and zero the columns
    # outside each head; a single full-width contraction then yields per-head scores.
    q_exp = jnp.concatenate([q3] * nhead, axis=1) * qmask            # (b, nhead*lq, D)

    s = jnp.einsum('bqd,bkd->bqk', q_exp, k3,
                   preferred_element_type=jnp.float32)               # (b, nhead*lq, lk)
    s = s - jnp.max(s, axis=-1, keepdims=True)
    p = jnp.exp(s)
    p = p / jnp.sum(p, axis=-1, keepdims=True)                       # exact softmax

    o_exp = jnp.einsum('bqk,bkd->bqd', p, v3,
                       preferred_element_type=jnp.float32)           # (b, nhead*lq, D)
    o_exp = o_exp * qmask          # keep only each head's own output columns

    # collapse the replicated head blocks back onto the original query rows
    o = o_exp[:, 0:lq, :]
    for h in range(1, nhead):
        o = o + o_exp[:, h * lq:(h + 1) * lq, :]
    o = o.reshape(nq, d)                                             # concat(heads)

    # ---- out-projection + residual + LayerNorm ----------------------------------
    proj = jnp.dot(o, wo, preferred_element_type=jnp.float32) + bo

    x = tgt + proj
    mu = jnp.mean(x, axis=-1, keepdims=True)
    xc = x - mu
    var = jnp.mean(xc * xc, axis=-1, keepdims=True)
    y = xc * jax.lax.rsqrt(var + EPS)
    out_ref[...] = y * gamma + beta


# -------------------- wrapper -------------------------------------------------
def cross_attention_layer(tgt, memory, query_pos, pos, params, *, nhead=NHEAD):
    """tgt/query_pos: (B, LQ, D), memory/pos: (B, LK, D)."""
    Bn, Lq, D = tgt.shape
    _, Lk, _ = memory.shape
    head_dim = D // nhead
    scale = 1.0 / math.sqrt(head_dim)
    nq, nk = Bn * Lq, Bn * Lk

    # one packed activation buffer -> 1 input DMA
    acts = jnp.concatenate(
        [tgt.reshape(nq, D), query_pos.reshape(nq, D),
         memory.reshape(nk, D), pos.reshape(nk, D)], axis=0).astype(jnp.float32)

    # one packed parameter buffer -> 1 input DMA
    # head mask: row block h (of size Lq) has 1s exactly in head h's columns
    row_head = np.repeat(np.arange(nhead), Lq)
    col_head = np.repeat(np.arange(nhead), head_dim)
    qmask = (row_head[:, None] == col_head[None, :]).astype(np.float32)   # (nhead*Lq, D)

    vecs = jnp.concatenate(
        [params["bq"] * scale, params["bk"], params["bv"],
         params["bo"], params["gamma"], params["beta"]], axis=0)           # (6, D)
    n_rows = 4 * D + nhead * Lq + 6
    n_pad = (-n_rows) % 8
    par = jnp.concatenate(
        [params["wq"].T * scale,           # fold q-scale into Wq.T (and bq above)
         params["wk"].T, params["wv"].T, params["wo"].T,
         jnp.asarray(qmask), vecs,
         jnp.zeros((n_pad, D), jnp.float32)], axis=0).astype(jnp.float32)

    kernel = partial(cross_attn_kernel, b=Bn, lq=Lq, lk=Lk,
                     nhead=nhead, head_dim=head_dim)

    flops = (2 * (nq + 2 * nk) * D * D            # in-projections
             + 2 * 2 * Bn * (nhead * Lq) * D * Lk  # scores + attn*V
             + 2 * nq * D * D)                     # out-projection
    transcendentals = Bn * nhead * Lq * Lk + nq    # exp + rsqrt
    bytes_accessed = 4 * (acts.size + par.size + nq * D)

    out2 = pl.pallas_call(
        kernel,
        out_shape=jax.ShapeDtypeStruct((nq, D), jnp.float32),
        grid_spec=pltpu.PrefetchScalarGridSpec(
            num_scalar_prefetch=0,
            grid=(1,),   # single step: whole (tiny) problem fits one block
            in_specs=[
                pl.BlockSpec(acts.shape, lambda i: (0, 0)),
                pl.BlockSpec(par.shape, lambda i: (0, 0)),
            ],
            out_specs=pl.BlockSpec((nq, D), lambda i: (0, 0)),
        ),
        compiler_params=pltpu.CompilerParams(
            dimension_semantics=("arbitrary",)),
        cost_estimate=pl.CostEstimate(flops=int(flops),
                                      transcendentals=int(transcendentals),
                                      bytes_accessed=int(bytes_accessed)),
    )(acts, par)

    return out2.reshape(Bn, Lq, D)


# -------------------- pure-JAX reference (silent sanity check) ---------------
def reference_forward(tgt, memory, query_pos, pos, params):
    q_in = tgt + query_pos
    k_in = memory + pos
    v_in = memory
    q = jnp.einsum("bld,ed->ble", q_in, params["wq"]) + params["bq"][0]
    k = jnp.einsum("bld,ed->ble", k_in, params["wk"]) + params["bk"][0]
    v = jnp.einsum("bld,ed->ble", v_in, params["wv"]) + params["bv"][0]

    def split(x):  # (B, L, D) -> (B, H, L, Dh)
        Bn, L, D = x.shape
        return x.reshape(Bn, L, NHEAD, HEAD_DIM).transpose(0, 2, 1, 3)

    qh, kh, vh = split(q) / math.sqrt(HEAD_DIM), split(k), split(v)
    s = jnp.einsum("bhqd,bhkd->bhqk", qh, kh)
    p = jax.nn.softmax(s, axis=-1)
    o = jnp.einsum("bhqk,bhkd->bhqd", p, vh)
    o = o.transpose(0, 2, 1, 3).reshape(tgt.shape[0], tgt.shape[1], D_MODEL)
    proj = jnp.einsum("bld,ed->ble", o, params["wo"]) + params["bo"][0]
    x = tgt + proj
    mu = jnp.mean(x, axis=-1, keepdims=True)
    var = jnp.mean((x - mu) ** 2, axis=-1, keepdims=True)
    y = (x - mu) * jax.lax.rsqrt(var + EPS)
    return y * params["gamma"][0] + params["beta"][0]


# -------------------- deterministic parameter init ----------------------------
def xavier_uniform(key, shape):
    fan_in, fan_out = shape[1], shape[0]
    a = math.sqrt(6.0 / (fan_in + fan_out))
    return jax.random.uniform(key, shape, jnp.float32, -a, a)


def make_params(key):
    ks = jax.random.split(key, 8)
    # nn.MultiheadAttention: in_proj_weight (3D, D) split into q/k/v, out_proj (D, D)
    wq = xavier_uniform(ks[0], (D_MODEL, D_MODEL))
    wk = xavier_uniform(ks[1], (D_MODEL, D_MODEL))
    wv = xavier_uniform(ks[2], (D_MODEL, D_MODEL))
    wo = xavier_uniform(ks[3], (D_MODEL, D_MODEL))
    bq = 0.02 * jax.random.normal(ks[4], (1, D_MODEL), jnp.float32)
    bk = 0.02 * jax.random.normal(ks[5], (1, D_MODEL), jnp.float32)
    bv = 0.02 * jax.random.normal(ks[6], (1, D_MODEL), jnp.float32)
    bo = jnp.zeros((1, D_MODEL), jnp.float32)            # PyTorch inits out_proj.bias to 0
    gamma = jnp.ones((1, D_MODEL), jnp.float32)          # LayerNorm weight
    beta = jnp.zeros((1, D_MODEL), jnp.float32)          # LayerNorm bias
    return dict(wq=wq, wk=wk, wv=wv, wo=wo, bq=bq, bk=bk, bv=bv, bo=bo,
                gamma=gamma, beta=beta)


if __name__ == "__main__":
    key = jax.random.PRNGKey(0)
    k_tgt, k_mem, k_qpos, k_pos, k_par = jax.random.split(key, 5)

    tgt = jax.random.normal(k_tgt, (B, LQ, D_MODEL), jnp.float32)
    memory = jax.random.normal(k_mem, (B, LK, D_MODEL), jnp.float32)
    query_pos = jax.random.normal(k_qpos, (B, LQ, D_MODEL), jnp.float32)
    pos = jax.random.normal(k_pos, (B, LK, D_MODEL), jnp.float32)
    params = make_params(k_par)

    out = cross_attention_layer(tgt, memory, query_pos, pos, params)
    out = jax.block_until_ready(out)

    ref = reference_forward(tgt, memory, query_pos, pos, params)
    np.testing.assert_allclose(np.asarray(out), np.asarray(ref), rtol=1e-4, atol=1e-5)

    # TODO(synk): memory_mask / memory_key_padding_mask are optional and None in this
    # synthetic setup; additive/boolean masking of the attention scores is not wired in.
    print("KERNEL_OK")
</pallas_src>

<mosaic_0001>
module attributes {stable_mosaic.version = 11 : i64} {
  func.func @cross_attn_kernel(%arg0: i32, %arg1: memref<96x32xf32, #tpu.memory_space<vmem>>, %arg2: memref<168x32xf32, #tpu.memory_space<vmem>>, %arg3: memref<16x32xf32, #tpu.memory_space<vmem>>) attributes {dimension_semantics = [#tpu.dimension_semantics<arbitrary>], iteration_bounds = array<i64: 1>, scalar_prefetch = 0 : i64, scratch_operands = 0 : i64, tpu.core_type = #tpu.core_type<tc>, window_params = [{pipeline_mode = #tpu.pipeline_mode<synchronous>, transform_indices = @transform_0, window_bounds = array<i64: 96, 32>}, {pipeline_mode = #tpu.pipeline_mode<synchronous>, transform_indices = @transform_1, window_bounds = array<i64: 168, 32>}, {pipeline_mode = #tpu.pipeline_mode<synchronous>, transform_indices = @transform_2, window_bounds = array<i64: 16, 32>}]} {
    %c0 = arith.constant 0 : index
    %c0_0 = arith.constant 0 : index
    %0 = vector.load %arg1[%c0, %c0_0] : memref<96x32xf32, #tpu.memory_space<vmem>>, vector<16x32xf32>
    %c16 = arith.constant 16 : index
    %c0_1 = arith.constant 0 : index
    %1 = vector.load %arg1[%c16, %c0_1] : memref<96x32xf32, #tpu.memory_space<vmem>>, vector<16x32xf32>
    %2 = arith.addf %0, %1 : vector<16x32xf32>
    %c32 = arith.constant 32 : index
    %c0_2 = arith.constant 0 : index
    %3 = vector.load %arg1[%c32, %c0_2] : memref<96x32xf32, #tpu.memory_space<vmem>>, vector<32x32xf32>
    %c64 = arith.constant 64 : index
    %c0_3 = arith.constant 0 : index
    %4 = vector.load %arg1[%c64, %c0_3] : memref<96x32xf32, #tpu.memory_space<vmem>>, vector<32x32xf32>
    %5 = arith.addf %3, %4 : vector<32x32xf32>
    %c0_4 = arith.constant 0 : index
    %c0_5 = arith.constant 0 : index
    %6 = vector.load %arg2[%c0_4, %c0_5] : memref<168x32xf32, #tpu.memory_space<vmem>>, vector<32x32xf32>
    %c32_6 = arith.constant 32 : index
    %c0_7 = arith.constant 0 : index
    %7 = vector.load %arg2[%c32_6, %c0_7] : memref<168x32xf32, #tpu.memory_space<vmem>>, vector<32x32xf32>
    %c64_8 = arith.constant 64 : index
    %c0_9 = arith.constant 0 : index
    %8 = vector.load %arg2[%c64_8, %c0_9] : memref<168x32xf32, #tpu.memory_space<vmem>>, vector<32x32xf32>
    %c96 = arith.constant 96 : index
    %c0_10 = arith.constant 0 : index
    %9 = vector.load %arg2[%c96, %c0_10] : memref<168x32xf32, #tpu.memory_space<vmem>>, vector<32x32xf32>
    %c128 = arith.constant 128 : index
    %c0_11 = arith.constant 0 : index
    %10 = vector.load %arg2[%c128, %c0_11] : memref<168x32xf32, #tpu.memory_space<vmem>>, vector<32x32xf32>
    %c160 = arith.constant 160 : index
    %c0_12 = arith.constant 0 : index
    %11 = vector.load %arg2[%c160, %c0_12] : memref<168x32xf32, #tpu.memory_space<vmem>>, vector<1x32xf32>
    %c161 = arith.constant 161 : index
    %c0_13 = arith.constant 0 : index
    %12 = vector.load %arg2[%c161, %c0_13] : memref<168x32xf32, #tpu.memory_space<vmem>>, vector<1x32xf32>
    %c162 = arith.constant 162 : index
    %c0_14 = arith.constant 0 : index
    %13 = vector.load %arg2[%c162, %c0_14] : memref<168x32xf32, #tpu.memory_space<vmem>>, vector<1x32xf32>
    %c163 = arith.constant 163 : index
    %c0_15 = arith.constant 0 : index
    %14 = vector.load %arg2[%c163, %c0_15] : memref<168x32xf32, #tpu.memory_space<vmem>>, vector<1x32xf32>
    %c164 = arith.constant 164 : index
    %c0_16 = arith.constant 0 : index
    %15 = vector.load %arg2[%c164, %c0_16] : memref<168x32xf32, #tpu.memory_space<vmem>>, vector<1x32xf32>
    %c165 = arith.constant 165 : index
    %c0_17 = arith.constant 0 : index
    %16 = vector.load %arg2[%c165, %c0_17] : memref<168x32xf32, #tpu.memory_space<vmem>>, vector<1x32xf32>
    %cst = arith.constant dense<0.000000e+00> : vector<16x32xf32>
    %17 = tpu.matmul %2, %6, %cst {dimension_numbers = #tpu.dot_dimension_numbers<[1], [0], [0], [1], [0, 0, 1, 1], [], []>} : vector<16x32xf32>, vector<32x32xf32>, vector<16x32xf32> -> vector<16x32xf32>
    %18 = vector.broadcast %11 : vector<1x32xf32> to vector<16x32xf32>
    %19 = arith.addf %17, %18 : vector<16x32xf32>
    %cst_18 = arith.constant dense<0.000000e+00> : vector<32x32xf32>
    %20 = tpu.matmul %5, %7, %cst_18 {dimension_numbers = #tpu.dot_dimension_numbers<[1], [0], [0], [1], [0, 0, 1, 1], [], []>} : vector<32x32xf32>, vector<32x32xf32>, vector<32x32xf32> -> vector<32x32xf32>
    %21 = vector.broadcast %12 : vector<1x32xf32> to vector<32x32xf32>
    %22 = arith.addf %20, %21 : vector<32x32xf32>
    %cst_19 = arith.constant dense<0.000000e+00> : vector<32x32xf32>
    %23 = tpu.matmul %3, %8, %cst_19 {dimension_numbers = #tpu.dot_dimension_numbers<[1], [0], [0], [1], [0, 0, 1, 1], [], []>} : vector<32x32xf32>, vector<32x32xf32>, vector<32x32xf32> -> vector<32x32xf32>
    %24 = vector.broadcast %13 : vector<1x32xf32> to vector<32x32xf32>
    %25 = arith.addf %23, %24 : vector<32x32xf32>
    %26 = vector.shape_cast %19 : vector<16x32xf32> to vector<2x8x32xf32>
    %27 = vector.shape_cast %22 : vector<32x32xf32> to vector<2x16x32xf32>
    %28 = vector.shape_cast %25 : vector<32x32xf32> to vector<2x16x32xf32>
    %29 = tpu.concatenate %26, %26, %26, %26 in 1 : vector<2x8x32xf32>, vector<2x8x32xf32>, vector<2x8x32xf32>, vector<2x8x32xf32> -> vector<2x32x32xf32>
    %30 = vector.shape_cast %10 : vector<32x32xf32> to vector<1x32x32xf32>
    %31 = vector.broadcast %30 : vector<1x32x32xf32> to vector<2x32x32xf32>
    %32 = arith.mulf %29, %31 : vector<2x32x32xf32>
    "tpu.trace_start"() <{level = 10 : i32, message = "bqd,bkd->bqk"}> : () -> ()
    %cst_20 = arith.constant dense<0.000000e+00> : vector<2x32x16xf32>
    %33 = tpu.matmul %32, %27, %cst_20 {dimension_numbers = #tpu.dot_dimension_numbers<[2], [2], [1], [1], [0, 0, 0, 1, 1, 1], [0], [0]>} : vector<2x32x32xf32>, vector<2x16x32xf32>, vector<2x32x16xf32> -> vector<2x32x16xf32>
    "tpu.trace_stop"() : () -> ()
    %cst_21 = arith.constant dense<0xFF800000> : vector<2x32xf32>
    %34 = vector.multi_reduction <maximumf>, %33, %cst_21 [2] : vector<2x32x16xf32> to vector<2x32xf32>
    %35 = vector.shape_cast %34 : vector<2x32xf32> to vector<2x32x1xf32>
    %36 = vector.broadcast %35 : vector<2x32x1xf32> to vector<2x32x16xf32>
    %37 = arith.subf %33, %36 : vector<2x32x16xf32>
    %38 = math.exp %37 : vector<2x32x16xf32>
    %cst_22 = arith.constant dense<0.000000e+00> : vector<2x32xf32>
    %39 = vector.multi_reduction <add>, %38, %cst_22 [2] : vector<2x32x16xf32> to vector<2x32xf32>
    %40 = vector.shape_cast %39 : vector<2x32xf32> to vector<2x32x1xf32>
    %41 = vector.broadcast %40 : vector<2x32x1xf32> to vector<2x32x16xf32>
    %42 = arith.divf %38, %41 : vector<2x32x16xf32>
    "tpu.trace_start"() <{level = 10 : i32, message = "bqk,bkd->bqd"}> : () -> ()
    %cst_23 = arith.constant dense<0.000000e+00> : vector<2x32x32xf32>
    %43 = tpu.matmul %42, %28, %cst_23 {dimension_numbers = #tpu.dot_dimension_numbers<[2], [1], [1], [2], [0, 0, 0, 1, 1, 2], [0], [0]>} : vector<2x32x16xf32>, vector<2x16x32xf32>, vector<2x32x32xf32> -> vector<2x32x32xf32>
    "tpu.trace_stop"() : () -> ()
    %44 = vector.shape_cast %10 : vector<32x32xf32> to vector<1x32x32xf32>
    %45 = vector.broadcast %44 : vector<1x32x32xf32> to vector<2x32x32xf32>
    %46 = arith.mulf %43, %45 : vector<2x32x32xf32>
    %47 = vector.extract_strided_slice %46 {offsets = [0, 0, 0], sizes = [2, 8, 32], strides = [1, 1, 1]} : vector<2x32x32xf32> to vector<2x8x32xf32>
    %48 = vector.extract_strided_slice %46 {offsets = [0, 8, 0], sizes = [2, 8, 32], strides = [1, 1, 1]} : vector<2x32x32xf32> to vector<2x8x32xf32>
    %49 = arith.addf %47, %48 : vector<2x8x32xf32>
    %50 = vector.extract_strided_slice %46 {offsets = [0, 16, 0], sizes = [2, 8, 32], strides = [1, 1, 1]} : vector<2x32x32xf32> to vector<2x8x32xf32>
    %51 = arith.addf %49, %50 : vector<2x8x32xf32>
    %52 = vector.extract_strided_slice %46 {offsets = [0, 24, 0], sizes = [2, 8, 32], strides = [1, 1, 1]} : vector<2x32x32xf32> to vector<2x8x32xf32>
    %53 = arith.addf %51, %52 : vector<2x8x32xf32>
    %54 = vector.shape_cast %53 : vector<2x8x32xf32> to vector<16x32xf32>
    %cst_24 = arith.constant dense<0.000000e+00> : vector<16x32xf32>
    %55 = tpu.matmul %54, %9, %cst_24 {dimension_numbers = #tpu.dot_dimension_numbers<[1], [0], [0], [1], [0, 0, 1, 1], [], []>} : vector<16x32xf32>, vector<32x32xf32>, vector<16x32xf32> -> vector<16x32xf32>
    %56 = vector.broadcast %14 : vector<1x32xf32> to vector<16x32xf32>
    %57 = arith.addf %55, %56 : vector<16x32xf32>
    %58 = arith.addf %0, %57 : vector<16x32xf32>
    %cst_25 = arith.constant dense<0.000000e+00> : vector<16xf32>
    %59 = vector.multi_reduction <add>, %58, %cst_25 [1] : vector<16x32xf32> to vector<16xf32>
    %60 = vector.shape_cast %59 : vector<16xf32> to vector<16x1xf32>
    %cst_26 = arith.constant 3.200000e+01 : f32
    %61 = vector.broadcast %cst_26 : f32 to vector<16x1xf32>
    %62 = arith.divf %60, %61 : vector<16x1xf32>
    %63 = vector.broadcast %62 : vector<16x1xf32> to vector<16x32xf32>
    %64 = arith.subf %58, %63 : vector<16x32xf32>
    %65 = arith.mulf %64, %64 : vector<16x32xf32>
    %cst_27 = arith.constant dense<0.000000e+00> : vector<16xf32>
    %66 = vector.multi_reduction <add>, %65, %cst_27 [1] : vector<16x32xf32> to vector<16xf32>
    %67 = vector.shape_cast %66 : vector<16xf32> to vector<16x1xf32>
    %cst_28 = arith.constant 3.200000e+01 : f32
    %68 = vector.broadcast %cst_28 : f32 to vector<16x1xf32>
    %69 = arith.divf %67, %68 : vector<16x1xf32>
    %cst_29 = arith.constant 9.99999974E-6 : f32
    %70 = vector.broadcast %cst_29 : f32 to vector<16x1xf32>
    %71 = arith.addf %69, %70 : vector<16x1xf32>
    %72 = math.rsqrt %71 : vector<16x1xf32>
    %73 = vector.broadcast %72 : vector<16x1xf32> to vector<16x32xf32>
    %74 = arith.mulf %64, %73 : vector<16x32xf32>
    %75 = vector.broadcast %15 : vector<1x32xf32> to vector<16x32xf32>
    %76 = arith.mulf %74, %75 : vector<16x32xf32>
    %77 = vector.broadcast %16 : vector<1x32xf32> to vector<16x32xf32>
    %78 = arith.addf %76, %77 : vector<16x32xf32>
    %c0_30 = arith.constant 0 : index
    %c0_31 = arith.constant 0 : index
    %79 = vector.load %arg3[%c0_30, %c0_31] : memref<16x32xf32, #tpu.memory_space<vmem>>, vector<16x32xf32>
    tpu.vector_store %arg3[%c0_30, %c0_31], %78 {strides = array<i32>} : memref<16x32xf32, #tpu.memory_space<vmem>>, vector<16x32xf32>,
    return
  }
  func.func @transform_0(%arg0: i32) -> (i32, i32) {
    %c0_i32 = arith.constant 0 : i32
    %c0_i32_0 = arith.constant 0 : i32
    %c0_i32_1 = arith.constant 0 : i32
    return %c0_i32, %c0_i32_0 : i32, i32
  }
  func.func @transform_1(%arg0: i32) -> (i32, i32) {
    %c0_i32 = arith.constant 0 : i32
    %c0_i32_0 = arith.constant 0 : i32
    %c0_i32_1 = arith.constant 0 : i32
    return %c0_i32, %c0_i32_0 : i32, i32
  }
  func.func @transform_2(%arg0: i32) -> (i32, i32) {
    %c0_i32 = arith.constant 0 : i32
    %c0_i32_0 = arith.constant 0 : i32
    %c0_i32_1 = arith.constant 0 : i32
    return %c0_i32, %c0_i32_0 : i32, i32
  }
}

</mosaic_0001>

<llo_original>
// kernel: tpu_custom_call.1
$region0: #{tpu_custom_call.1}
  #allocation0 [shape = 'u32[]', space=smem, size = 0x4, offset = 0x4, fixed_abs, tag = 'smem constant byte address 0x4 - core index']
  #allocation1 [shape = 'u32[144,128]{1,0:T(1,128)}', space=vmem, size = 0x12000, scoped, tag = 'internal scratch']
  %s0 = inlined_call_operand.vmem [shape: f32[96,32], index: 0, kind: input, shape index: {}]
  %s1 = inlined_call_operand.vmem [shape: f32[168,32], index: 1, kind: input, shape index: {}]
  %s2 = inlined_call_operand.hbm [shape: f32[16,32], index: 2, kind: output, shape index: {}]
  %s3 = sld [smem:[#allocation0]]
  $region18: #{tpu_custom_call.1} parent=0
    _
  %s5 = ssub.s32 1, %s3
  %s6 = scalar_select 0, %s5, %s3
  $region1: #{tpu_custom_call.1} parent=0
    #allocation2 [shape = 'u8[8192]{0}', space=vmem, size = 0x2000, scoped, tag = 'output window, operand 0, single buffered']
    #allocation3 [shape = 's32[1]{0}', space=sflag, size = 0x4, scoped, tag = 'scoped memory for tpu_custom_call.1']
    %7 = vsyncpa [#allocation3], 0
    // Predicated region
    $region2: #{tpu_custom_call.1} parent=1 // pred_check
      _
    $region3: #{tpu_custom_call.1} parent=1 // pred_check_branch
      %9 = sbr.rel (0) target = $region5
    $region4: #{tpu_custom_call.1} parent=1 // pred_region
      _
    $region5: #{tpu_custom_call.1} parent=1 // pred_fallthru
      _
    // Predicated region
    $region6: #{tpu_custom_call.1} parent=1 // pred_check
      _
    $region7: #{tpu_custom_call.1} parent=1 // pred_check_branch
      %11 = sbr.rel (0) target = $region9
    $region8: #{tpu_custom_call.1} parent=1 // pred_region
      _
    $region9: #{tpu_custom_call.1} parent=1 // pred_fallthru
      _
    %v12 = vld [vmem:[%s0] sm:$0xff]
    %v13 = vld [vmem:[%s0 + $0x8] sm:$0xff]
    %v14 = vld [vmem:[%s0 + $0x10] sm:$0xff]
    %v15 = vld [vmem:[%s0 + $0x18] sm:$0xff]
    %v16 = vadd.f32 %v12, %v14
    %v17 = vadd.f32 %v13, %v15
    %v18 = vld [vmem:[%s0 + $0x20] sm:$0xff]
    %v19 = vld [vmem:[%s0 + $0x28] sm:$0xff]
    %v20 = vld [vmem:[%s0 + $0x30] sm:$0xff]
    %v21 = vld [vmem:[%s0 + $0x38] sm:$0xff]
    %v22 = vld [vmem:[%s0 + $0x40] sm:$0xff]
    %v23 = vld [vmem:[%s0 + $0x48] sm:$0xff]
    %v24 = vld [vmem:[%s0 + $0x50] sm:$0xff]
    %v25 = vld [vmem:[%s0 + $0x58] sm:$0xff]
    %v26 = vadd.f32 %v18, %v22
    %v27 = vadd.f32 %v19, %v23
    %v28 = vadd.f32 %v20, %v24
    %v29 = vadd.f32 %v21, %v25
    %v30 = vld [vmem:[%s1] sm:$0xff]
    %v31 = vld [vmem:[%s1 + $0x8] sm:$0xff]
    %v32 = vld [vmem:[%s1 + $0x10] sm:$0xff]
    %v33 = vld [vmem:[%s1 + $0x18] sm:$0xff]
    %v34 = vld [vmem:[%s1 + $0x20] sm:$0xff]
    %v35 = vld [vmem:[%s1 + $0x28] sm:$0xff]
    %v36 = vld [vmem:[%s1 + $0x30] sm:$0xff]
    %v37 = vld [vmem:[%s1 + $0x38] sm:$0xff]
    %v38 = vld [vmem:[%s1 + $0x40] sm:$0xff]
    %v39 = vld [vmem:[%s1 + $0x48] sm:$0xff]
    %v40 = vld [vmem:[%s1 + $0x50] sm:$0xff]
    %v41 = vld [vmem:[%s1 + $0x58] sm:$0xff]
    %v42 = vld [vmem:[%s1 + $0x60] sm:$0xff]
    %v43 = vld [vmem:[%s1 + $0x68] sm:$0xff]
    %v44 = vld [vmem:[%s1 + $0x70] sm:$0xff]
    %v45 = vld [vmem:[%s1 + $0x78] sm:$0xff]
    %v46 = vld [vmem:[%s1 + $0x80] sm:$0xff]
    %v47 = vld [vmem:[%s1 + $0x88] sm:$0xff]
    %v48 = vld [vmem:[%s1 + $0x90] sm:$0xff]
    %v49 = vld [vmem:[%s1 + $0x98] sm:$0xff]
    %v50 = vld [vmem:[%s1 + $0xa0] sm:$0x1]
    %v51 = vld [vmem:[%s1 + $0xa1] sm:$0x1]
    %v52 = vld [vmem:[%s1 + $0xa2] sm:$0x1]
    %v53 = vld [vmem:[%s1 + $0xa3] sm:$0x1]
    %v54 = vld [vmem:[%s1 + $0xa4] sm:$0x1]
    %v55 = vld [vmem:[%s1 + $0xa5] sm:$0x1]
    %v56 = vlaneseq
    %v57 = vshrl.u32 %v56, 7
    %v58 = vsub.s32 0, %v57
    %v59 = vrot.slane %v50, %v58
    %vm60 = vcmask 261120
    %v62 = vsel %vm60, %v16, 0
    %v65 = vsel %vm60, %v17, 0
    %67 = vmatprep.subr.mxu0 0.0
    %68 = vmatpush1.msra.mxu0 %v30
    %69 = vmatprep.subr.mxu0 0.0
    %70 = vmatpush1.msra.mxu0 %v31
    %71 = vmatprep.subr.mxu0 0.0
    %72 = vmatpush1.msra.mxu0 %v32
    %73 = vmatprep.subr.mxu0 0.0
    %74 = vmatpush1.msra.mxu0 %v33
    %75 = vmatprep.subr.mxu0 0.0
    %76 = vmatpush1.msra.mxu0 0.0
    %77 = vmatprep.subr.mxu0 0.0
    %78 = vmatpush1.msra.mxu0 0.0
    %79 = vmatprep.subr.mxu0 0.0
    %80 = vmatpush1.msra.mxu0 0.0
    %81 = vmatprep.subr.mxu0 0.0
    %82 = vmatpush1.msra.mxu0 0.0
    %83 = vmatprep.subr.mxu0 0.0
    %84 = vmatpush1.msra.mxu0 0.0
    %85 = vmatprep.subr.mxu0 0.0
    %86 = vmatpush1.msra.mxu0 0.0
    %87 = vmatprep.subr.mxu0 0.0
    %88 = vmatpush1.msra.mxu0 0.0
    %89 = vmatprep.subr.mxu0 0.0
    %90 = vmatpush1.msra.mxu0 0.0
    %91 = vmatprep.subr.mxu0 0.0
    %92 = vmatpush1.msra.mxu0 0.0
    %93 = vmatprep.subr.mxu0 0.0
    %94 = vmatpush1.msra.mxu0 0.0
    %95 = vmatprep.subr.mxu0 0.0
    %96 = vmatpush1.msra.mxu0 0.0
    %97 = vmatprep.subr.mxu0 0.0
    %98 = vmatpush1.msra.mxu0 0.0
    %99 = vmatprep.subr.mxu0 0.0
    %100 = vmatpush1.msra.mxu0 0.0
    %101 = vmatprep.subr.mxu0 0.0
    %102 = vmatpush1.msra.mxu0 0.0
    %103 = vmatprep.subr.mxu0 0.0
    %104 = vmatpush1.msra.mxu0 0.0
    %105 = vmatprep.subr.mxu0 0.0
    %106 = vmatpush1.msra.mxu0 0.0
    %107 = vmatprep.subr.mxu0 0.0
    %108 = vmatpush1.msra.mxu0 0.0
    %109 = vmatprep.subr.mxu0 0.0
    %110 = vmatpush1.msra.mxu0 0.0
    %111 = vmatprep.subr.mxu0 0.0
    %112 = vmatpush1.msra.mxu0 0.0
    %113 = vmatprep.subr.mxu0 0.0
    %114 = vmatpush1.msra.mxu0 0.0
    %115 = vmatprep.subr.mxu0 0.0
    %116 = vmatpush1.msra.mxu0 0.0
    %117 = vmatprep.subr.mxu0 0.0
    %118 = vmatpush1.msra.mxu0 0.0
    %119 = vmatprep.subr.mxu0 0.0
    %120 = vmatpush1.msra.mxu0 0.0
    %121 = vmatprep.subr.mxu0 0.0
    %122 = vmatpush1.msra.mxu0 0.0
    %123 = vmatprep.subr.mxu0 0.0
    %124 = vmatpush1.msra.mxu0 0.0
    %125 = vmatprep.subr.mxu0 0.0
    %126 = vmatpush1.msra.mxu0 0.0
    %127 = vmatprep.subr.mxu0 0.0
    %128 = vmatpush1.msra.mxu0 0.0
    %129 = vmatprep.subr.mxu0 0.0
    %130 = vmatpush1.msra.mxu0 0.0
    %131 = vmatprep.mubr.f32.mxu0 0.0
    %132 = vmatmul.mubr.f32.gmra.mrb[0].mxu0 %v62
    %v133 = vpop.f32.mrb[0].mxu0
    %v134 = vadd.f32 %v59, %v133
    %v135 = vpop.f32.mrb[0].mxu0
    %136 = vmatprep.mubr.f32.mxu0 0.0
    %137 = vmatmul.mubr.f32.gmra.mrb[0].mxu0 %v65
    %v138 = vpop.f32.mrb[0].mxu0
    %v139 = vadd.f32 %v59, %v138
    %v140 = vpop.f32.mrb[0].mxu0
    %141 = vdwg.mxu0
    %v142 = vlaneseq
    %v143 = vshrl.u32 %v142, 7
    %v144 = vsub.s32 0, %v143
    %v145 = vrot.slane %v51, %v144
    %v147 = vsel %vm60, %v26, 0
    %v150 = vsel %vm60, %v27, 0
    %v153 = vsel %vm60, %v28, 0
    %v156 = vsel %vm60, %v29, 0
    %158 = vmatprep.subr.mxu0 0.0
    %159 = vmatpush1.msra.mxu0 %v34
    %160 = vmatprep.subr.mxu0 0.0
    %161 = vmatpush1.msra.mxu0 %v35
    %162 = vmatprep.subr.mxu0 0.0
    %163 = vmatpush1.msra.mxu0 %v36
    %164 = vmatprep.subr.mxu0 0.0
    %165 = vmatpush1.msra.mxu0 %v37
    %166 = vmatprep.subr.mxu0 0.0
    %167 = vmatpush1.msra.mxu0 0.0
    %168 = vmatprep.subr.mxu0 0.0
    %169 = vmatpush1.msra.mxu0 0.0
    %170 = vmatprep.subr.mxu0 0.0
    %171 = vmatpush1.msra.mxu0 0.0
    %172 = vmatprep.subr.mxu0 0.0
    %173 = vmatpush1.msra.mxu0 0.0
    %174 = vmatprep.subr.mxu0 0.0
    %175 = vmatpush1.msra.mxu0 0.0
    %176 = vmatprep.subr.mxu0 0.0
    %177 = vmatpush1.msra.mxu0 0.0
    %178 = vmatprep.subr.mxu0 0.0
    %179 = vmatpush1.msra.mxu0 0.0
    %180 = vmatprep.subr.mxu0 0.0
    %181 = vmatpush1.msra.mxu0 0.0
    %182 = vmatprep.subr.mxu0 0.0
    %183 = vmatpush1.msra.mxu0 0.0
    %184 = vmatprep.subr.mxu0 0.0
    %185 = vmatpush1.msra.mxu0 0.0
    %186 = vmatprep.subr.mxu0 0.0
    %187 = vmatpush1.msra.mxu0 0.0
    %188 = vmatprep.subr.mxu0 0.0
    %189 = vmatpush1.msra.mxu0 0.0
    %190 = vmatprep.subr.mxu0 0.0
    %191 = vmatpush1.msra.mxu0 0.0
    %192 = vmatprep.subr.mxu0 0.0
    %193 = vmatpush1.msra.mxu0 0.0
    %194 = vmatprep.subr.mxu0 0.0
    %195 = vmatpush1.msra.mxu0 0.0
    %196 = vmatprep.subr.mxu0 0.0
    %197 = vmatpush1.msra.mxu0 0.0
    %198 = vmatprep.subr.mxu0 0.0
    %199 = vmatpush1.msra.mxu0 0.0
    %200 = vmatprep.subr.mxu0 0.0
    %201 = vmatpush1.msra.mxu0 0.0
    %202 = vmatprep.subr.mxu0 0.0
    %203 = vmatpush1.msra.mxu0 0.0
    %204 = vmatprep.subr.mxu0 0.0
    %205 = vmatpush1.msra.mxu0 0.0
    %206 = vmatprep.subr.mxu0 0.0
    %207 = vmatpush1.msra.mxu0 0.0
    %208 = vmatprep.subr.mxu0 0.0
    %209 = vmatpush1.msra.mxu0 0.0
    %210 = vmatprep.subr.mxu0 0.0
    %211 = vmatpush1.msra.mxu0 0.0
    %212 = vmatprep.subr.mxu0 0.0
    %213 = vmatpush1.msra.mxu0 0.0
    %214 = vmatprep.subr.mxu0 0.0
    %215 = vmatpush1.msra.mxu0 0.0
    %216 = vmatprep.subr.mxu0 0.0
    %217 = vmatpush1.msra.mxu0 0.0
    %218 = vmatprep.subr.mxu0 0.0
    %219 = vmatpush1.msra.mxu0 0.0
    %220 = vmatprep.subr.mxu0 0.0
    %221 = vmatpush1.msra.mxu0 0.0
    %222 = vmatprep.mubr.f32.mxu0 0.0
    %223 = vmatmul.mubr.f32.gmra.mrb[0].mxu0 %v147
    %v224 = vpop.f32.mrb[0].mxu0
    %v225 = vadd.f32 %v145, %v224
    %v226 = vpop.f32.mrb[0].mxu0
    %227 = vmatprep.mubr.f32.mxu0 0.0
    %228 = vmatmul.mubr.f32.gmra.mrb[0].mxu0 %v150
    %v229 = vpop.f32.mrb[0].mxu0
    %v230 = vadd.f32 %v145, %v229
    %v231 = vpop.f32.mrb[0].mxu0
    %232 = vmatprep.mubr.f32.mxu0 0.0
    %233 = vmatmul.mubr.f32.gmra.mrb[0].mxu0 %v153
    %v234 = vpop.f32.mrb[0].mxu0
    %v235 = vadd.f32 %v145, %v234
    %v236 = vpop.f32.mrb[0].mxu0
    %237 = vmatprep.mubr.f32.mxu0 0.0
    %238 = vmatmul.mubr.f32.gmra.mrb[0].mxu0 %v156
    %v239 = vpop.f32.mrb[0].mxu0
    %v240 = vadd.f32 %v145, %v239
    %v241 = vpop.f32.mrb[0].mxu0
    %242 = vdwg.mxu0
    %v243 = vlaneseq
    %v244 = vshrl.u32 %v243, 7
    %v245 = vsub.s32 0, %v244
    %v246 = vrot.slane %v52, %v245
    %v248 = vsel %vm60, %v18, 0
    %v251 = vsel %vm60, %v19, 0
    %v254 = vsel %vm60, %v20, 0
    %v257 = vsel %vm60, %v21, 0
    %259 = vmatprep.subr.mxu0 0.0
    %260 = vmatpush1.msra.mxu0 %v38
    %261 = vmatprep.subr.mxu0 0.0
    %262 = vmatpush1.msra.mxu0 %v39
    %263 = vmatprep.subr.mxu0 0.0
    %264 = vmatpush1.msra.mxu0 %v40
    %265 = vmatprep.subr.mxu0 0.0
    %266 = vmatpush1.msra.mxu0 %v41
    %267 = vmatprep.subr.mxu0 0.0
    %268 = vmatpush1.msra.mxu0 0.0
    %269 = vmatprep.subr.mxu0 0.0
    %270 = vmatpush1.msra.mxu0 0.0
    %271 = vmatprep.subr.mxu0 0.0
    %272 = vmatpush1.msra.mxu0 0.0
    %273 = vmatprep.subr.mxu0 0.0
    %274 = vmatpush1.msra.mxu0 0.0
    %275 = vmatprep.subr.mxu0 0.0
    %276 = vmatpush1.msra.mxu0 0.0
    %277 = vmatprep.subr.mxu0 0.0
    %278 = vmatpush1.msra.mxu0 0.0
    %279 = vmatprep.subr.mxu0 0.0
    %280 = vmatpush1.msra.mxu0 0.0
    %281 = vmatprep.subr.mxu0 0.0
    %282 = vmatpush1.msra.mxu0 0.0
    %283 = vmatprep.subr.mxu0 0.0
    %284 = vmatpush1.msra.mxu0 0.0
    %285 = vmatprep.subr.mxu0 0.0
    %286 = vmatpush1.msra.mxu0 0.0
    %287 = vmatprep.subr.mxu0 0.0
    %288 = vmatpush1.msra.mxu0 0.0
    %289 = vmatprep.subr.mxu0 0.0
    %290 = vmatpush1.msra.mxu0 0.0
    %291 = vmatprep.subr.mxu0 0.0
    %292 = vmatpush1.msra.mxu0 0.0
    %293 = vmatprep.subr.mxu0 0.0
    %294 = vmatpush1.msra.mxu0 0.0
    %295 = vmatprep.subr.mxu0 0.0
    %296 = vmatpush1.msra.mxu0 0.0
    %297 = vmatprep.subr.mxu0 0.0
    %298 = vmatpush1.msra.mxu0 0.0
    %299 = vmatprep.subr.mxu0 0.0
    %300 = vmatpush1.msra.mxu0 0.0
    %301 = vmatprep.subr.mxu0 0.0
    %302 = vmatpush1.msra.mxu0 0.0
    %303 = vmatprep.subr.mxu0 0.0
    %304 = vmatpush1.msra.mxu0 0.0
    %305 = vmatprep.subr.mxu0 0.0
    %306 = vmatpush1.msra.mxu0 0.0
    %307 = vmatprep.subr.mxu0 0.0
    %308 = vmatpush1.msra.mxu0 0.0
    %309 = vmatprep.subr.mxu0 0.0
    %310 = vmatpush1.msra.mxu0 0.0
    %311 = vmatprep.subr.mxu0 0.0
    %312 = vmatpush1.msra.mxu0 0.0
    %313 = vmatprep.subr.mxu0 0.0
    %314 = vmatpush1.msra.mxu0 0.0
    %315 = vmatprep.subr.mxu0 0.0
    %316 = vmatpush1.msra.mxu0 0.0
    %317 = vmatprep.subr.mxu0 0.0
    %318 = vmatpush1.msra.mxu0 0.0
    %319 = vmatprep.subr.mxu0 0.0
    %320 = vmatpush1.msra.mxu0 0.0
    %321 = vmatprep.subr.mxu0 0.0
    %322 = vmatpush1.msra.mxu0 0.0
    %323 = vmatprep.mubr.f32.mxu0 0.0
    %324 = vmatmul.mubr.f32.gmra.mrb[0].mxu0 %v248
    %v325 = vpop.f32.mrb[0].mxu0
    %v326 = vadd.f32 %v246, %v325
    %v327 = vpop.f32.mrb[0].mxu0
    %328 = vmatprep.mubr.f32.mxu0 0.0
    %329 = vmatmul.mubr.f32.gmra.mrb[0].mxu0 %v251
    %v330 = vpop.f32.mrb[0].mxu0
    %v331 = vadd.f32 %v246, %v330
    %v332 = vpop.f32.mrb[0].mxu0
    %333 = vmatprep.mubr.f32.mxu0 0.0
    %334 = vmatmul.mubr.f32.gmra.mrb[0].mxu0 %v254
    %v335 = vpop.f32.mrb[0].mxu0
    %v336 = vadd.f32 %v246, %v335
    %v337 = vpop.f32.mrb[0].mxu0
    %338 = vmatprep.mubr.f32.mxu0 0.0
    %339 = vmatmul.mubr.f32.gmra.mrb[0].mxu0 %v257
    %v340 = vpop.f32.mrb[0].mxu0
    %v341 = vadd.f32 %v246, %v340
    %v342 = vpop.f32.mrb[0].mxu0
    %343 = vdwg.mxu0
    %v344 = vmul.f32 %v134, %v46
    %v345 = vmul.f32 %v134, %v47
    %v346 = vmul.f32 %v134, %v48
    %v347 = vmul.f32 %v134, %v49
    %v348 = vmul.f32 %v139, %v46
    %v349 = vmul.f32 %v139, %v47
    %v350 = vmul.f32 %v139, %v48
    %v351 = vmul.f32 %v139, %v49
    %v353 = vsel %vm60, %v344, 0
    %v356 = vsel %vm60, %v345, 0
    %v359 = vsel %vm60, %v346, 0
    %v362 = vsel %vm60, %v347, 0
    %v365 = vsel %vm60, %v225, 0
    %v368 = vsel %vm60, %v230, 0
    %370 = vmatprep.subr.mxu0 0.0
    %371 = vmatpush1.xpose.msra.mxu0 %v365
    %372 = vmatprep.subr.mxu0 0.0
    %373 = vmatpush1.xpose.msra.mxu0 %v368
    %374 = vmatprep.subr.mxu0 0.0
    %375 = vmatpush1.xpose.msra.mxu0 0.0
    %376 = vmatprep.subr.mxu0 0.0
    %377 = vmatpush1.xpose.msra.mxu0 0.0
    %378 = vmatprep.subr.mxu0 0.0
    %379 = vmatpush1.xpose.msra.mxu0 0.0
    %380 = vmatprep.subr.mxu0 0.0
    %381 = vmatpush1.xpose.msra.mxu0 0.0
    %382 = vmatprep.subr.mxu0 0.0
    %383 = vmatpush1.xpose.msra.mxu0 0.0
    %384 = vmatprep.subr.mxu0 0.0
    %385 = vmatpush1.xpose.msra.mxu0 0.0
    %386 = vmatprep.subr.mxu0 0.0
    %387 = vmatpush1.xpose.msra.mxu0 0.0
    %388 = vmatprep.subr.mxu0 0.0
    %389 = vmatpush1.xpose.msra.mxu0 0.0
    %390 = vmatprep.subr.mxu0 0.0
    %391 = vmatpush1.xpose.msra.mxu0 0.0
    %392 = vmatprep.subr.mxu0 0.0
    %393 = vmatpush1.xpose.msra.mxu0 0.0
    %394 = vmatprep.subr.mxu0 0.0
    %395 = vmatpush1.xpose.msra.mxu0 0.0
    %396 = vmatprep.subr.mxu0 0.0
    %397 = vmatpush1.xpose.msra.mxu0 0.0
    %398 = vmatprep.subr.mxu0 0.0
    %399 = vmatpush1.xpose.msra.mxu0 0.0
    %400 = vmatprep.subr.mxu0 0.0
    %401 = vmatpush1.xpose.msra.mxu0 0.0
    %402 = vmatprep.subr.mxu0 0.0
    %403 = vmatpush1.xpose.msra.mxu0 0.0
    %404 = vmatprep.subr.mxu0 0.0
    %405 = vmatpush1.xpose.msra.mxu0 0.0
    %406 = vmatprep.subr.mxu0 0.0
    %407 = vmatpush1.xpose.msra.mxu0 0.0
    %408 = vmatprep.subr.mxu0 0.0
    %409 = vmatpush1.xpose.msra.mxu0 0.0
    %410 = vmatprep.subr.mxu0 0.0
    %411 = vmatpush1.xpose.msra.mxu0 0.0
    %412 = vmatprep.subr.mxu0 0.0
    %413 = vmatpush1.xpose.msra.mxu0 0.0
    %414 = vmatprep.subr.mxu0 0.0
    %415 = vmatpush1.xpose.msra.mxu0 0.0
    %416 = vmatprep.subr.mxu0 0.0
    %417 = vmatpush1.xpose.msra.mxu0 0.0
    %418 = vmatprep.subr.mxu0 0.0
    %419 = vmatpush1.xpose.msra.mxu0 0.0
    %420 = vmatprep.subr.mxu0 0.0
    %421 = vmatpush1.xpose.msra.mxu0 0.0
    %422 = vmatprep.subr.mxu0 0.0
    %423 = vmatpush1.xpose.msra.mxu0 0.0
    %424 = vmatprep.subr.mxu0 0.0
    %425 = vmatpush1.xpose.msra.mxu0 0.0
    %426 = vmatprep.subr.mxu0 0.0
    %427 = vmatpush1.xpose.msra.mxu0 0.0
    %428 = vmatprep.subr.mxu0 0.0
    %429 = vmatpush1.xpose.msra.mxu0 0.0
    %430 = vmatprep.subr.mxu0 0.0
    %431 = vmatpush1.xpose.msra.mxu0 0.0
    %432 = vmatprep.subr.mxu0 0.0
    %433 = vmatpush1.xpose.msra.mxu0 0.0
    %434 = vmatprep.mubr.f32.mxu0 0.0
    %435 = vmatmul.mubr.f32.gmra.mrb[0].mxu0 %v353
    %v436 = vpop.f32.mrb[0].mxu0
    %v437 = vadd.f32 0.0, %v436
    %v438 = vpop.f32.mrb[0].mxu0
    %439 = vmatprep.mubr.f32.mxu0 0.0
    %440 = vmatmul.mubr.f32.gmra.mrb[0].mxu0 %v356
    %v441 = vpop.f32.mrb[0].mxu0
    %v442 = vadd.f32 0.0, %v441
    %v443 = vpop.f32.mrb[0].mxu0
    %444 = vmatprep.mubr.f32.mxu0 0.0
    %445 = vmatmul.mubr.f32.gmra.mrb[0].mxu0 %v359
    %v446 = vpop.f32.mrb[0].mxu0
    %v447 = vadd.f32 0.0, %v446
    %v448 = vpop.f32.mrb[0].mxu0
    %449 = vmatprep.mubr.f32.mxu0 0.0
    %450 = vmatmul.mubr.f32.gmra.mrb[0].mxu0 %v362
    %v451 = vpop.f32.mrb[0].mxu0
    %v452 = vadd.f32 0.0, %v451
    %v453 = vpop.f32.mrb[0].mxu0
    %454 = vdwg.mxu0
    %v456 = vsel %vm60, %v348, 0
    %v459 = vsel %vm60, %v349, 0
    %v462 = vsel %vm60, %v350, 0
    %v465 = vsel %vm60, %v351, 0
    %v468 = vsel %vm60, %v235, 0
    %v471 = vsel %vm60, %v240, 0
    %473 = vmatprep.subr.mxu0 0.0
    %474 = vmatpush1.xpose.msra.mxu0 %v468
    %475 = vmatprep.subr.mxu0 0.0
    %476 = vmatpush1.xpose.msra.mxu0 %v471
    %477 = vmatprep.subr.mxu0 0.0
    %478 = vmatpush1.xpose.msra.mxu0 0.0
    %479 = vmatprep.subr.mxu0 0.0
    %480 = vmatpush1.xpose.msra.mxu0 0.0
    %481 = vmatprep.subr.mxu0 0.0
    %482 = vmatpush1.xpose.msra.mxu0 0.0
    %483 = vmatprep.subr.mxu0 0.0
    %484 = vmatpush1.xpose.msra.mxu0 0.0
    %485 = vmatprep.subr.mxu0 0.0
    %486 = vmatpush1.xpose.msra.mxu0 0.0
    %487 = vmatprep.subr.mxu0 0.0
    %488 = vmatpush1.xpose.msra.mxu0 0.0
    %489 = vmatprep.subr.mxu0 0.0
    %490 = vmatpush1.xpose.msra.mxu0 0.0
    %491 = vmatprep.subr.mxu0 0.0
    %492 = vmatpush1.xpose.msra.mxu0 0.0
    %493 = vmatprep.subr.mxu0 0.0
    %494 = vmatpush1.xpose.msra.mxu0 0.0
    %495 = vmatprep.subr.mxu0 0.0
    %496 = vmatpush1.xpose.msra.mxu0 0.0
    %497 = vmatprep.subr.mxu0 0.0
    %498 = vmatpush1.xpose.msra.mxu0 0.0
    %499 = vmatprep.subr.mxu0 0.0
    %500 = vmatpush1.xpose.msra.mxu0 0.0
    %501 = vmatprep.subr.mxu0 0.0
    %502 = vmatpush1.xpose.msra.mxu0 0.0
    %503 = vmatprep.subr.mxu0 0.0
    %504 = vmatpush1.xpose.msra.mxu0 0.0
    %505 = vmatprep.subr.mxu0 0.0
    %506 = vmatpush1.xpose.msra.mxu0 0.0
    %507 = vmatprep.subr.mxu0 0.0
    %508 = vmatpush1.xpose.msra.mxu0 0.0
    %509 = vmatprep.subr.mxu0 0.0
    %510 = vmatpush1.xpose.msra.mxu0 0.0
    %511 = vmatprep.subr.mxu0 0.0
    %512 = vmatpush1.xpose.msra.mxu0 0.0
    %513 = vmatprep.subr.mxu0 0.0
    %514 = vmatpush1.xpose.msra.mxu0 0.0
    %515 = vmatprep.subr.mxu0 0.0
    %516 = vmatpush1.xpose.msra.mxu0 0.0
    %517 = vmatprep.subr.mxu0 0.0
    %518 = vmatpush1.xpose.msra.mxu0 0.0
    %519 = vmatprep.subr.mxu0 0.0
    %520 = vmatpush1.xpose.msra.mxu0 0.0
    %521 = vmatprep.subr.mxu0 0.0
    %522 = vmatpush1.xpose.msra.mxu0 0.0
    %523 = vmatprep.subr.mxu0 0.0
    %524 = vmatpush1.xpose.msra.mxu0 0.0
    %525 = vmatprep.subr.mxu0 0.0
    %526 = vmatpush1.xpose.msra.mxu0 0.0
    %527 = vmatprep.subr.mxu0 0.0
    %528 = vmatpush1.xpose.msra.mxu0 0.0
    %529 = vmatprep.subr.mxu0 0.0
    %530 = vmatpush1.xpose.msra.mxu0 0.0
    %531 = vmatprep.subr.mxu0 0.0
    %532 = vmatpush1.xpose.msra.mxu0 0.0
    %533 = vmatprep.subr.mxu0 0.0
    %534 = vmatpush1.xpose.msra.mxu0 0.0
    %535 = vmatprep.subr.mxu0 0.0
    %536 = vmatpush1.xpose.msra.mxu0 0.0
    %537 = vmatprep.mubr.f32.mxu0 0.0
    %538 = vmatmul.mubr.f32.gmra.mrb[0].mxu0 %v456
    %v539 = vpop.f32.mrb[0].mxu0
    %v540 = vadd.f32 0.0, %v539
    %v541 = vpop.f32.mrb[0].mxu0
    %542 = vmatprep.mubr.f32.mxu0 0.0
    %543 = vmatmul.mubr.f32.gmra.mrb[0].mxu0 %v459
    %v544 = vpop.f32.mrb[0].mxu0
    %v545 = vadd.f32 0.0, %v544
    %v546 = vpop.f32.mrb[0].mxu0
    %547 = vmatprep.mubr.f32.mxu0 0.0
    %548 = vmatmul.mubr.f32.gmra.mrb[0].mxu0 %v462
    %v549 = vpop.f32.mrb[0].mxu0
    %v550 = vadd.f32 0.0, %v549
    %v551 = vpop.f32.mrb[0].mxu0
    %552 = vmatprep.mubr.f32.mxu0 0.0
    %553 = vmatmul.mubr.f32.gmra.mrb[0].mxu0 %v465
    %v554 = vpop.f32.mrb[0].mxu0
    %v555 = vadd.f32 0.0, %v554
    %v556 = vpop.f32.mrb[0].mxu0
    %557 = vdwg.mxu0
    %vm558 = vcmask 130048
    %v559 = vsel %vm558, %v437, -inf
    %560 = vmax.xlane.f32.xlu0 %v559
    %v561 = vpop.xlane.xlu0 %560
    %v562 = vsel %vm558, %v442, -inf
    %563 = vmax.xlane.f32.xlu0 %v562
    %v564 = vpop.xlane.xlu0 %563
    %v565 = vsel %vm558, %v447, -inf
    %566 = vmax.xlane.f32.xlu0 %v565
    %v567 = vpop.xlane.xlu0 %566
    %v568 = vsel %vm558, %v452, -inf
    %569 = vmax.xlane.f32.xlu0 %v568
    %v570 = vpop.xlane.xlu0 %569
    %v571 = vsel %vm558, %v540, -inf
    %572 = vmax.xlane.f32.xlu0 %v571
    %v573 = vpop.xlane.xlu0 %572
    %v574 = vsel %vm558, %v545, -inf
    %575 = vmax.xlane.f32.xlu0 %v574
    %v576 = vpop.xlane.xlu0 %575
    %v577 = vsel %vm558, %v550, -inf
    %578 = vmax.xlane.f32.xlu0 %v577
    %v579 = vpop.xlane.xlu0 %578
    %v580 = vsel %vm558, %v555, -inf
    %581 = vmax.xlane.f32.xlu0 %v580
    %v582 = vpop.xlane.xlu0 %581
    %v583 = vsub.f32 %v437, %v561
    %v584 = vsub.f32 %v442, %v564
    %v585 = vsub.f32 %v447, %v567
    %v586 = vsub.f32 %v452, %v570
    %v587 = vsub.f32 %v540, %v573
    %v588 = vsub.f32 %v545, %v576
    %v589 = vsub.f32 %v550, %v579
    %v590 = vsub.f32 %v555, %v582
    %v591 = vmul.f32 %v583, 1.442695
    %v592 = vpow.pop %v591
    %v593 = vmul.f32 %v584, 1.442695
    %v594 = vpow.pop %v593
    %v595 = vmul.f32 %v585, 1.442695
    %v596 = vpow.pop %v595
    %v597 = vmul.f32 %v586, 1.442695
    %v598 = vpow.pop %v597
    %v599 = vmul.f32 %v587, 1.442695
    %v600 = vpow.pop %v599
    %v601 = vmul.f32 %v588, 1.442695
    %v602 = vpow.pop %v601
    %v603 = vmul.f32 %v589, 1.442695
    %v604 = vpow.pop %v603
    %v605 = vmul.f32 %v590, 1.442695
    %v606 = vpow.pop %v605
    %v607 = vsel %vm558, %v592, 0.0
    %608 = vadd.xlane.f32.xlu0 %v607
    %v609 = vpop.xlane.xlu0 %608
    %v610 = vsel %vm558, %v594, 0.0
    %611 = vadd.xlane.f32.xlu0 %v610
    %v612 = vpop.xlane.xlu0 %611
    %v613 = vsel %vm558, %v596, 0.0
    %614 = vadd.xlane.f32.xlu0 %v613
    %v615 = vpop.xlane.xlu0 %614
    %v616 = vsel %vm558, %v598, 0.0
    %617 = vadd.xlane.f32.xlu0 %v616
    %v618 = vpop.xlane.xlu0 %617
    %v619 = vsel %vm558, %v600, 0.0
    %620 = vadd.xlane.f32.xlu0 %v619
    %v621 = vpop.xlane.xlu0 %620
    %v622 = vsel %vm558, %v602, 0.0
    %623 = vadd.xlane.f32.xlu0 %v622
    %v624 = vpop.xlane.xlu0 %623
    %v625 = vsel %vm558, %v604, 0.0
    %626 = vadd.xlane.f32.xlu0 %v625
    %v627 = vpop.xlane.xlu0 %626
    %v628 = vsel %vm558, %v606, 0.0
    %629 = vadd.xlane.f32.xlu0 %v628
    %v630 = vpop.xlane.xlu0 %629
    %v631 = vrcp.pop %v609
    %v632 = vmul.f32 %v592, %v631
    %v633 = vrcp.pop %v612
    %v634 = vmul.f32 %v594, %v633
    %v635 = vrcp.pop %v615
    %v636 = vmul.f32 %v596, %v635
    %v637 = vrcp.pop %v618
    %v638 = vmul.f32 %v598, %v637
    %v639 = vrcp.pop %v621
    %v640 = vmul.f32 %v600, %v639
    %v641 = vrcp.pop %v624
    %v642 = vmul.f32 %v602, %v641
    %v643 = vrcp.pop %v627
    %v644 = vmul.f32 %v604, %v643
    %v645 = vrcp.pop %v630
    %v646 = vmul.f32 %v606, %v645
    %v648 = vsel %vm558, %v632, 0
    %v651 = vsel %vm558, %v634, 0
    %v654 = vsel %vm558, %v636, 0
    %v657 = vsel %vm558, %v638, 0
    %659 = vmatprep.subr.mxu0 0.0
    %660 = vmatpush1.msra.mxu0 %v326
    %661 = vmatprep.subr.mxu0 0.0
    %662 = vmatpush1.msra.mxu0 %v331
    %663 = vmatprep.subr.mxu0 0.0
    %664 = vmatpush1.msra.mxu0 0.0
    %665 = vmatprep.subr.mxu0 0.0
    %666 = vmatpush1.msra.mxu0 0.0
    %667 = vmatprep.subr.mxu0 0.0
    %668 = vmatpush1.msra.mxu0 0.0
    %669 = vmatprep.subr.mxu0 0.0
    %670 = vmatpush1.msra.mxu0 0.0
    %671 = vmatprep.subr.mxu0 0.0
    %672 = vmatpush1.msra.mxu0 0.0
    %673 = vmatprep.subr.mxu0 0.0
    %674 = vmatpush1.msra.mxu0 0.0
    %675 = vmatprep.subr.mxu0 0.0
    %676 = vmatpush1.msra.mxu0 0.0
    %677 = vmatprep.subr.mxu0 0.0
    %678 = vmatpush1.msra.mxu0 0.0
    %679 = vmatprep.subr.mxu0 0.0
    %680 = vmatpush1.msra.mxu0 0.0
    %681 = vmatprep.subr.mxu0 0.0
    %682 = vmatpush1.msra.mxu0 0.0
    %683 = vmatprep.subr.mxu0 0.0
    %684 = vmatpush1.msra.mxu0 0.0
    %685 = vmatprep.subr.mxu0 0.0
    %686 = vmatpush1.msra.mxu0 0.0
    %687 = vmatprep.subr.mxu0 0.0
    %688 = vmatpush1.msra.mxu0 0.0
    %689 = vmatprep.subr.mxu0 0.0
    %690 = vmatpush1.msra.mxu0 0.0
    %691 = vmatprep.subr.mxu0 0.0
    %692 = vmatpush1.msra.mxu0 0.0
    %693 = vmatprep.subr.mxu0 0.0
    %694 = vmatpush1.msra.mxu0 0.0
    %695 = vmatprep.subr.mxu0 0.0
    %696 = vmatpush1.msra.mxu0 0.0
    %697 = vmatprep.subr.mxu0 0.0
    %698 = vmatpush1.msra.mxu0 0.0
    %699 = vmatprep.subr.mxu0 0.0
    %700 = vmatpush1.msra.mxu0 0.0
    %701 = vmatprep.subr.mxu0 0.0
    %702 = vmatpush1.msra.mxu0 0.0
    %703 = vmatprep.subr.mxu0 0.0
    %704 = vmatpush1.msra.mxu0 0.0
    %705 = vmatprep.subr.mxu0 0.0
    %706 = vmatpush1.msra.mxu0 0.0
    %707 = vmatprep.subr.mxu0 0.0
    %708 = vmatpush1.msra.mxu0 0.0
    %709 = vmatprep.subr.mxu0 0.0
    %710 = vmatpush1.msra.mxu0 0.0
    %711 = vmatprep.subr.mxu0 0.0
    %712 = vmatpush1.msra.mxu0 0.0
    %713 = vmatprep.subr.mxu0 0.0
    %714 = vmatpush1.msra.mxu0 0.0
    %715 = vmatprep.subr.mxu0 0.0
    %716 = vmatpush1.msra.mxu0 0.0
    %717 = vmatprep.subr.mxu0 0.0
    %718 = vmatpush1.msra.mxu0 0.0
    %719 = vmatprep.subr.mxu0 0.0
    %720 = vmatpush1.msra.mxu0 0.0
    %721 = vmatprep.subr.mxu0 0.0
    %722 = vmatpush1.msra.mxu0 0.0
    %723 = vmatprep.mubr.f32.mxu0 0.0
    %724 = vmatmul.mubr.f32.gmra.mrb[0].mxu0 %v648
    %v725 = vpop.f32.mrb[0].mxu0
    %v726 = vadd.f32 0.0, %v725
    %v727 = vpop.f32.mrb[0].mxu0
    %728 = vmatprep.mubr.f32.mxu0 0.0
    %729 = vmatmul.mubr.f32.gmra.mrb[0].mxu0 %v651
    %v730 = vpop.f32.mrb[0].mxu0
    %v731 = vadd.f32 0.0, %v730
    %v732 = vpop.f32.mrb[0].mxu0
    %733 = vmatprep.mubr.f32.mxu0 0.0
    %734 = vmatmul.mubr.f32.gmra.mrb[0].mxu0 %v654
    %v735 = vpop.f32.mrb[0].mxu0
    %v736 = vadd.f32 0.0, %v735
    %v737 = vpop.f32.mrb[0].mxu0
    %738 = vmatprep.mubr.f32.mxu0 0.0
    %739 = vmatmul.mubr.f32.gmra.mrb[0].mxu0 %v657
    %v740 = vpop.f32.mrb[0].mxu0
    %v741 = vadd.f32 0.0, %v740
    %v742 = vpop.f32.mrb[0].mxu0
    %743 = vdwg.mxu0
    %v745 = vsel %vm558, %v640, 0
    %v748 = vsel %vm558, %v642, 0
    %v751 = vsel %vm558, %v644, 0
    %v754 = vsel %vm558, %v646, 0
    %756 = vmatprep.subr.mxu0 0.0
    %757 = vmatpush1.msra.mxu0 %v336
    %758 = vmatprep.subr.mxu0 0.0
    %759 = vmatpush1.msra.mxu0 %v341
    %760 = vmatprep.subr.mxu0 0.0
    %761 = vmatpush1.msra.mxu0 0.0
    %762 = vmatprep.subr.mxu0 0.0
    %763 = vmatpush1.msra.mxu0 0.0
    %764 = vmatprep.subr.mxu0 0.0
    %765 = vmatpush1.msra.mxu0 0.0
    %766 = vmatprep.subr.mxu0 0.0
    %767 = vmatpush1.msra.mxu0 0.0
    %768 = vmatprep.subr.mxu0 0.0
    %769 = vmatpush1.msra.mxu0 0.0
    %770 = vmatprep.subr.mxu0 0.0
    %771 = vmatpush1.msra.mxu0 0.0
    %772 = vmatprep.subr.mxu0 0.0
    %773 = vmatpush1.msra.mxu0 0.0
    %774 = vmatprep.subr.mxu0 0.0
    %775 = vmatpush1.msra.mxu0 0.0
    %776 = vmatprep.subr.mxu0 0.0
    %777 = vmatpush1.msra.mxu0 0.0
    %778 = vmatprep.subr.mxu0 0.0
    %779 = vmatpush1.msra.mxu0 0.0
    %780 = vmatprep.subr.mxu0 0.0
    %781 = vmatpush1.msra.mxu0 0.0
    %782 = vmatprep.subr.mxu0 0.0
    %783 = vmatpush1.msra.mxu0 0.0
    %784 = vmatprep.subr.mxu0 0.0
    %785 = vmatpush1.msra.mxu0 0.0
    %786 = vmatprep.subr.mxu0 0.0
    %787 = vmatpush1.msra.mxu0 0.0
    %788 = vmatprep.subr.mxu0 0.0
    %789 = vmatpush1.msra.mxu0 0.0
    %790 = vmatprep.subr.mxu0 0.0
    %791 = vmatpush1.msra.mxu0 0.0
    %792 = vmatprep.subr.mxu0 0.0
    %793 = vmatpush1.msra.mxu0 0.0
    %794 = vmatprep.subr.mxu0 0.0
    %795 = vmatpush1.msra.mxu0 0.0
    %796 = vmatprep.subr.mxu0 0.0
    %797 = vmatpush1.msra.mxu0 0.0
    %798 = vmatprep.subr.mxu0 0.0
    %799 = vmatpush1.msra.mxu0 0.0
    %800 = vmatprep.subr.mxu0 0.0
    %801 = vmatpush1.msra.mxu0 0.0
    %802 = vmatprep.subr.mxu0 0.0
    %803 = vmatpush1.msra.mxu0 0.0
    %804 = vmatprep.subr.mxu0 0.0
    %805 = vmatpush1.msra.mxu0 0.0
    %806 = vmatprep.subr.mxu0 0.0
    %807 = vmatpush1.msra.mxu0 0.0
    %808 = vmatprep.subr.mxu0 0.0
    %809 = vmatpush1.msra.mxu0 0.0
    %810 = vmatprep.subr.mxu0 0.0
    %811 = vmatpush1.msra.mxu0 0.0
    %812 = vmatprep.subr.mxu0 0.0
    %813 = vmatpush1.msra.mxu0 0.0
    %814 = vmatprep.subr.mxu0 0.0
    %815 = vmatpush1.msra.mxu0 0.0
    %816 = vmatprep.subr.mxu0 0.0
    %817 = vmatpush1.msra.mxu0 0.0
    %818 = vmatprep.subr.mxu0 0.0
    %819 = vmatpush1.msra.mxu0 0.0
    %820 = vmatprep.mubr.f32.mxu0 0.0
    %821 = vmatmul.mubr.f32.gmra.mrb[0].mxu0 %v745
    %v822 = vpop.f32.mrb[0].mxu0
    %v823 = vadd.f32 0.0, %v822
    %v824 = vpop.f32.mrb[0].mxu0
    %825 = vmatprep.mubr.f32.mxu0 0.0
    %826 = vmatmul.mubr.f32.gmra.mrb[0].mxu0 %v748
    %v827 = vpop.f32.mrb[0].mxu0
    %v828 = vadd.f32 0.0, %v827
    %v829 = vpop.f32.mrb[0].mxu0
    %830 = vmatprep.mubr.f32.mxu0 0.0
    %831 = vmatmul.mubr.f32.gmra.mrb[0].mxu0 %v751
    %v832 = vpop.f32.mrb[0].mxu0
    %v833 = vadd.f32 0.0, %v832
    %v834 = vpop.f32.mrb[0].mxu0
    %835 = vmatprep.mubr.f32.mxu0 0.0
    %836 = vmatmul.mubr.f32.gmra.mrb[0].mxu0 %v754
    %v837 = vpop.f32.mrb[0].mxu0
    %v838 = vadd.f32 0.0, %v837
    %v839 = vpop.f32.mrb[0].mxu0
    %840 = vdwg.mxu0
    %v841 = vmul.f32 %v726, %v46
    %v842 = vmul.f32 %v731, %v47
    %v843 = vmul.f32 %v736, %v48
    %v844 = vmul.f32 %v741, %v49
    %v845 = vmul.f32 %v823, %v46
    %v846 = vmul.f32 %v828, %v47
    %v847 = vmul.f32 %v833, %v48
    %v848 = vmul.f32 %v838, %v49
    %v849 = vadd.f32 %v841, %v842
    %v850 = vadd.f32 %v845, %v846
    %v851 = vadd.f32 %v849, %v843
    %v852 = vadd.f32 %v850, %v847
    %v853 = vadd.f32 %v851, %v844
    %v854 = vadd.f32 %v852, %v848
    %v855 = vlaneseq
    %v856 = vshrl.u32 %v855, 7
    %v857 = vsub.s32 0, %v856
    %v858 = vrot.slane %v53, %v857
    %v860 = vsel %vm60, %v853, 0
    %v863 = vsel %vm60, %v854, 0
    %865 = vmatprep.subr.mxu0 0.0
    %866 = vmatpush1.msra.mxu0 %v42
    %867 = vmatprep.subr.mxu0 0.0
    %868 = vmatpush1.msra.mxu0 %v43
    %869 = vmatprep.subr.mxu0 0.0
    %870 = vmatpush1.msra.mxu0 %v44
    %871 = vmatprep.subr.mxu0 0.0
    %872 = vmatpush1.msra.mxu0 %v45
    %873 = vmatprep.subr.mxu0 0.0
    %874 = vmatpush1.msra.mxu0 0.0
    %875 = vmatprep.subr.mxu0 0.0
    %876 = vmatpush1.msra.mxu0 0.0
    %877 = vmatprep.subr.mxu0 0.0
    %878 = vmatpush1.msra.mxu0 0.0
    %879 = vmatprep.subr.mxu0 0.0
    %880 = vmatpush1.msra.mxu0 0.0
    %881 = vmatprep.subr.mxu0 0.0
    %882 = vmatpush1.msra.mxu0 0.0
    %883 = vmatprep.subr.mxu0 0.0
    %884 = vmatpush1.msra.mxu0 0.0
    %885 = vmatprep.subr.mxu0 0.0
    %886 = vmatpush1.msra.mxu0 0.0
    %887 = vmatprep.subr.mxu0 0.0
    %888 = vmatpush1.msra.mxu0 0.0
    %889 = vmatprep.subr.mxu0 0.0
    %890 = vmatpush1.msra.mxu0 0.0
    %891 = vmatprep.subr.mxu0 0.0
    %892 = vmatpush1.msra.mxu0 0.0
    %893 = vmatprep.subr.mxu0 0.0
    %894 = vmatpush1.msra.mxu0 0.0
    %895 = vmatprep.subr.mxu0 0.0
    %896 = vmatpush1.msra.mxu0 0.0
    %897 = vmatprep.subr.mxu0 0.0
    %898 = vmatpush1.msra.mxu0 0.0
    %899 = vmatprep.subr.mxu0 0.0
    %900 = vmatpush1.msra.mxu0 0.0
    %901 = vmatprep.subr.mxu0 0.0
    %902 = vmatpush1.msra.mxu0 0.0
    %903 = vmatprep.subr.mxu0 0.0
    %904 = vmatpush1.msra.mxu0 0.0
    %905 = vmatprep.subr.mxu0 0.0
    %906 = vmatpush1.msra.mxu0 0.0
    %907 = vmatprep.subr.mxu0 0.0
    %908 = vmatpush1.msra.mxu0 0.0
    %909 = vmatprep.subr.mxu0 0.0
    %910 = vmatpush1.msra.mxu0 0.0
    %911 = vmatprep.subr.mxu0 0.0
    %912 = vmatpush1.msra.mxu0 0.0
    %913 = vmatprep.subr.mxu0 0.0
    %914 = vmatpush1.msra.mxu0 0.0
    %915 = vmatprep.subr.mxu0 0.0
    %916 = vmatpush1.msra.mxu0 0.0
    %917 = vmatprep.subr.mxu0 0.0
    %918 = vmatpush1.msra.mxu0 0.0
    %919 = vmatprep.subr.mxu0 0.0
    %920 = vmatpush1.msra.mxu0 0.0
    %921 = vmatprep.subr.mxu0 0.0
    %922 = vmatpush1.msra.mxu0 0.0
    %923 = vmatprep.subr.mxu0 0.0
    %924 = vmatpush1.msra.mxu0 0.0
    %925 = vmatprep.subr.mxu0 0.0
    %926 = vmatpush1.msra.mxu0 0.0
    %927 = vmatprep.subr.mxu0 0.0
    %928 = vmatpush1.msra.mxu0 0.0
    %929 = vmatprep.mubr.f32.mxu0 0.0
    %930 = vmatmul.mubr.f32.gmra.mrb[0].mxu0 %v860
    %v931 = vpop.f32.mrb[0].mxu0
    %v932 = vadd.f32 %v858, %v931
    %v933 = vpop.f32.mrb[0].mxu0
    %934 = vmatprep.mubr.f32.mxu0 0.0
    %935 = vmatmul.mubr.f32.gmra.mrb[0].mxu0 %v863
    %v936 = vpop.f32.mrb[0].mxu0
    %v937 = vadd.f32 %v858, %v936
    %v938 = vpop.f32.mrb[0].mxu0
    %939 = vdwg.mxu0
    %v940 = vadd.f32 %v12, %v932
    %v941 = vadd.f32 %v13, %v937
    %v942 = vsel %vm60, %v940, 0.0
    %943 = vadd.xlane.f32.xlu0 %v942
    %v944 = vpop.xlane.xlu0 %943
    %v945 = vsel %vm60, %v941, 0.0
    %946 = vadd.xlane.f32.xlu0 %v945
    %v947 = vpop.xlane.xlu0 %946
    %v948 = vrcp.pop 32.0
    %v949 = vmul.f32 %v944, %v948
    %v950 = vmul.f32 %v947, %v948
    %v951 = vsub.f32 %v940, %v949
    %v952 = vsub.f32 %v941, %v950
    %v953 = vmul.f32 %v951, %v951
    %v954 = vmul.f32 %v952, %v952
    %v955 = vsel %vm60, %v953, 0.0
    %956 = vadd.xlane.f32.xlu0 %v955
    %v957 = vpop.xlane.xlu0 %956
    %v958 = vsel %vm60, %v954, 0.0
    %959 = vadd.xlane.f32.xlu0 %v958
    %v960 = vpop.xlane.xlu0 %959
    %v961 = vmul.f32 %v957, %v948
    %v962 = vmul.f32 %v960, %v948
    %v963 = vadd.f32 %v961, 1e-05
    %v964 = vadd.f32 %v962, 1e-05
    %v965 = vrsqrt.pop %v963
    %v966 = vrsqrt.pop %v964
    %v967 = vmul.f32 %v951, %v965
    %v968 = vmul.f32 %v952, %v966
    %v969 = vlaneseq
    %v970 = vshrl.u32 %v969, 7
    %v971 = vsub.s32 0, %v970
    %v972 = vrot.slane %v54, %v971
    %v973 = vmul.f32 %v967, %v972
    %v974 = vmul.f32 %v968, %v972
    %v975 = vlaneseq
    %v976 = vshrl.u32 %v975, 7
    %v977 = vsub.s32 0, %v976
    %v978 = vrot.slane %v55, %v977
    %v979 = vadd.f32 %v973, %v978
    %v980 = vadd.f32 %v974, %v978
    %981 = vst.msk [vmem:[#allocation2] sm:$0xff] %vm60, %v979
    %982 = vst.msk [vmem:[#allocation2 + $0x8] sm:$0xff] %vm60, %v980
    // Predicated region
    $region10: #{tpu_custom_call.1} parent=1 // pred_check
      _
    $region11: #{tpu_custom_call.1} parent=1 // pred_check_branch
      %984 = sbr.rel (0) target = $region13
    $region12: #{tpu_custom_call.1} parent=1 // pred_region
      %s986 = ssub.s32 256, 256
      %987 = vsyncadd [#allocation3], %s986
      %s988 = sshll.u32 [#allocation2], 4
      %s989 = int_to_ptr.vmem [resolvable:$true] %s988
      %994 = dma.vmem_to_hbm [thread:$0]  %s989, 256, %s2, [#allocation3], 128, 128, 8
    $region13: #{tpu_custom_call.1} parent=1 // pred_fallthru
      _
    // Predicated region
    $region14: #{tpu_custom_call.1} parent=1 // pred_check
      _
    $region15: #{tpu_custom_call.1} parent=1 // pred_check_branch
      %996 = sbr.rel (0) target = $region17
    $region16: #{tpu_custom_call.1} parent=1 // pred_region
      %997 = dma.done [#allocation3], 256
    $region17: #{tpu_custom_call.1} parent=1 // pred_fallthru
      _
    %998 = vsyncpa [#allocation3], 1

</llo_original>
